<compile_context>
chip_gen: v7x
topology: tpu7x:2x2x1
jax: 0.10.0
libtpu: 0.0.40
codegen_flags: <defaults>
</compile_context>

<pallas_src>
import numpy as np
import jax
import jax.numpy as jnp
from jax.experimental import pallas as pl
from jax.experimental.pallas import tpu as pltpu

# ----- static model config (small synthetic shapes) -----
B = 2      # batch
N = 4      # number of graph nodes == input_size
T = 8      # seq_len
K = 3      # temporal conv kernel size (GTCN)
C = 8      # num_channels == node_dim (GTCN output channels)
D = 8      # GraphFusion out_feature == node_dim
L = 2      # num_levels
Q = 3      # num_quantiles
TAU = 4    # tau (forecast horizon per quantile head)
NB = N * B
BT = B * T
ROWS = N * B * T          # 64 rows, row = n*(B*T) + b*T + t
TP = T + K - 1

# ----- packed-parameter buffer layout (all section starts 8-row aligned) -----
PC = 64                    # buffer lane width (needs >= ROWS for kron(adj, I))
R_WF = 0                   # (K, L*C)  temporal filter weights, cols [l*C+c]
R_WG = 8                   # (K, L*C)  temporal gate weights
R_BF = 16                  # (1, L*C)
R_BG = 24                  # (1, L*C)
R_WGF = 32                 # (L*C, L*D) block-diagonal feature transform
R_BGF = 48                 # (1, L*D)
R_WQ = 56                  # (T, Q*TAU) fused quantile heads
R_BQ = 64                  # (1, Q*TAU)
R_SKIP = 72                # (B, T)  sum_n x[b,n,t]
R_ABIG = 80                # (ROWS, ROWS) = kron(adj, I_{B*T})
PR = R_ABIG + ROWS         # 144 rows total


def kernel(shifts_ref, p_ref, out_ref):
    shifts = shifts_ref[...]                                   # (ROWS, K)

    # --- GTCN gated causal conv for ALL levels: two small MXU matmuls ---
    hf = (jnp.dot(shifts, p_ref[R_WF:R_WF + K, 0:L * C],
                  preferred_element_type=jnp.float32)
          + p_ref[R_BF:R_BF + 1, 0:L * C])                     # (ROWS, L*C)
    hg = (jnp.dot(shifts, p_ref[R_WG:R_WG + K, 0:L * C],
                  preferred_element_type=jnp.float32)
          + p_ref[R_BG:R_BG + 1, 0:L * C])
    gated = jnp.tanh(hf) * jax.nn.sigmoid(hg)                  # (ROWS, L*C)

    # --- per-level feature transform as one block-diagonal matmul ---
    z = jnp.dot(gated, p_ref[R_WGF:R_WGF + L * C, 0:L * D],
                preferred_element_type=jnp.float32)            # (ROWS, L*D)

    # --- adjacency mixing: kron(adj, I_{B*T}) @ z  (single MXU call) ---
    y = jnp.dot(p_ref[R_ABIG:R_ABIG + ROWS, 0:ROWS], z,
                preferred_element_type=jnp.float32)            # (ROWS, L*D)
    gf = jnp.maximum(y + p_ref[R_BGF:R_BGF + 1, 0:L * D], 0.0)

    # --- reduce over nodes and (level-concatenated) features -> (B, T) ---
    gf4 = gf.reshape(N, B, T, L * D)        # layout-preserving sublane split
    fsum = jnp.sum(gf4, axis=0)             # (B, T, L*D)
    fsum = jnp.sum(fsum, axis=-1)           # (B, T)

    # skip connection h += x.transpose(2,1).unsqueeze(-1): after the mean over
    # nodes & features it contributes L*D * sum_n x[b,n,t].
    skip_bt = p_ref[R_SKIP:R_SKIP + B, 0:T]                    # (B, T)
    fusion = (fsum + (L * D) * skip_bt) * (1.0 / (N * L * D))  # (B, T)

    # --- all Q quantile heads fused into one matmul + one store ---
    out_ref[...] = (jnp.dot(fusion, p_ref[R_WQ:R_WQ + T, 0:Q * TAU],
                            preferred_element_type=jnp.float32)
                    + p_ref[R_BQ:R_BQ + 1, 0:Q * TAU])         # (B, Q*TAU)


def _pack_params(adj, wf, bf, wg, bg, wgf, bgf, wq, bq, skip_bt):
    p = jnp.zeros((PR, PC), jnp.float32)
    # temporal conv weights: cols indexed by l*C + c
    p = p.at[R_WF:R_WF + K, 0:L * C].set(
        jnp.transpose(wf, (1, 0, 2)).reshape(K, L * C))
    p = p.at[R_WG:R_WG + K, 0:L * C].set(
        jnp.transpose(wg, (1, 0, 2)).reshape(K, L * C))
    p = p.at[R_BF:R_BF + 1, 0:L * C].set(bf.reshape(1, L * C))
    p = p.at[R_BG:R_BG + 1, 0:L * C].set(bg.reshape(1, L * C))
    # block-diagonal feature transform (level l maps cols l*C.. -> l*D..)
    wgf_bd = jnp.zeros((L * C, L * D), jnp.float32)
    for l in range(L):
        wgf_bd = wgf_bd.at[l * C:(l + 1) * C, l * D:(l + 1) * D].set(wgf[l])
    p = p.at[R_WGF:R_WGF + L * C, 0:L * D].set(wgf_bd)
    p = p.at[R_BGF:R_BGF + 1, 0:L * D].set(bgf.reshape(1, L * D))
    # fused quantile heads: cols indexed by q*TAU + tau
    p = p.at[R_WQ:R_WQ + T, 0:Q * TAU].set(
        jnp.transpose(wq, (1, 0, 2)).reshape(T, Q * TAU))
    p = p.at[R_BQ:R_BQ + 1, 0:Q * TAU].set(bq.reshape(1, Q * TAU))
    # skip term and block-expanded adjacency
    p = p.at[R_SKIP:R_SKIP + B, 0:T].set(skip_bt)
    p = p.at[R_ABIG:R_ABIG + ROWS, 0:ROWS].set(
        jnp.kron(adj.astype(jnp.float32), jnp.eye(BT, dtype=jnp.float32)))
    return p


def _forward(x, adj, wf, bf, wg, bg, wgf, bgf, wq, bq):
    # causal left-pad, node-major flatten, assemble (ROWS, K) shift matrix
    xpad = jnp.pad(x, ((0, 0), (0, 0), (K - 1, 0)))            # (B, N, TP)
    xpad_nb = jnp.transpose(xpad, (1, 0, 2)).reshape(NB, TP)   # (N*B, TP)
    shifts = jnp.stack([xpad_nb[:, k:k + T] for k in range(K)], axis=-1)
    shifts = shifts.reshape(ROWS, K)                           # (64, 3)

    params = _pack_params(adj, wf, bf, wg, bg, wgf, bgf, wq, bq,
                          jnp.sum(x, axis=1))                  # skip = (B, T)

    out_bqt = pl.pallas_call(
        kernel,
        out_shape=jax.ShapeDtypeStruct((B, Q * TAU), jnp.float32),
        in_specs=[pl.BlockSpec(memory_space=pltpu.MemorySpace.VMEM)] * 2,
        out_specs=pl.BlockSpec(memory_space=pltpu.MemorySpace.VMEM),
    )(shifts, params)

    # torch: cat over quantiles (dim=-1) then unsqueeze(-2) -> (B, tau, 1, Q)
    return jnp.transpose(out_bqt.reshape(B, Q, TAU), (0, 2, 1))[:, :, None, :]


hsdstm_forward = jax.jit(_forward)


def reference(x, adj, wf, bf, wg, bg, wgf, bgf, wq, bq):
    """Pure-JAX reference mirroring the PyTorch forward semantics."""
    xpad = jnp.pad(x, ((0, 0), (0, 0), (K - 1, 0)))
    shifts = jnp.stack([xpad[:, :, k:k + T] for k in range(K)], axis=-1)  # (B,N,T,K)
    outs = []
    for l in range(L):
        hf = jnp.einsum('bntk,kc->bntc', shifts, wf[l]) + bf[l][0]
        hg = jnp.einsum('bntk,kc->bntc', shifts, wg[l]) + bg[l][0]
        g = jnp.tanh(hf) * jax.nn.sigmoid(hg)                 # (B,N,T,C)
        z = jnp.einsum('bntc,cd->bntd', g, wgf[l])
        y = jnp.einsum('nm,bmtd->bntd', adj, z)
        gf = jnp.maximum(y + bgf[l][0], 0.0)
        h = gf + x[:, :, :, None]                             # skip (B,N,T,1)
        outs.append(h)
    fusion = jnp.concatenate(outs, axis=-1)                   # (B,N,T,L*D)
    fusion = fusion.mean(axis=1).mean(axis=-1)                # (B,T)
    qs = [fusion @ wq[q] + bq[q][0] for q in range(Q)]
    return jnp.stack(qs, axis=-1)[:, :, None, :]              # (B,TAU,1,Q)


if __name__ == "__main__":
    key = jax.random.PRNGKey(0)
    ks = jax.random.split(key, 9)
    x = jax.random.normal(ks[0], (B, N, T), jnp.float32)
    wf = 0.3 * jax.random.normal(ks[1], (L, K, C), jnp.float32)
    bf = 0.1 * jax.random.normal(ks[2], (L, 1, C), jnp.float32)
    wg = 0.3 * jax.random.normal(ks[3], (L, K, C), jnp.float32)
    bg = 0.1 * jax.random.normal(ks[4], (L, 1, C), jnp.float32)
    wgf = 0.3 * jax.random.normal(ks[5], (L, C, D), jnp.float32)
    bgf = 0.1 * jax.random.normal(ks[6], (L, 1, D), jnp.float32)
    wq = 0.3 * jax.random.normal(ks[7], (Q, T, TAU), jnp.float32)
    bq = 0.1 * jax.random.normal(ks[8], (Q, 1, TAU), jnp.float32)

    # deterministic ring adjacency with self loops, row-normalized
    adj_np = (np.eye(N, dtype=np.float32)
              + np.roll(np.eye(N, dtype=np.float32), 1, axis=1)
              + np.roll(np.eye(N, dtype=np.float32), -1, axis=1))
    adj_np /= adj_np.sum(axis=1, keepdims=True)
    adj = jnp.asarray(adj_np)

    out = hsdstm_forward(x, adj, wf, bf, wg, bg, wgf, bgf, wq, bq)
    out = jax.block_until_ready(out)

    ref = reference(x, adj, wf, bf, wg, bg, wgf, bgf, wq, bq)
    assert out.shape == (B, TAU, 1, Q), out.shape
    np.testing.assert_allclose(np.asarray(out), np.asarray(ref),
                               rtol=2e-3, atol=2e-3)
    print("KERNEL_OK")
</pallas_src>

<mosaic_0001>
module attributes {stable_mosaic.version = 11 : i64} {
  func.func @kernel(%arg0: memref<64x3xf32, #tpu.memory_space<vmem>>, %arg1: memref<144x64xf32, #tpu.memory_space<vmem>>, %arg2: memref<2x12xf32, #tpu.memory_space<vmem>>) attributes {dimension_semantics = [], scalar_prefetch = 0 : i64, scratch_operands = 0 : i64, tpu.core_type = #tpu.core_type<tc>} {
    %c0 = arith.constant 0 : index
    %c0_0 = arith.constant 0 : index
    %0 = vector.load %arg0[%c0, %c0_0] : memref<64x3xf32, #tpu.memory_space<vmem>>, vector<64x3xf32>
    %c0_1 = arith.constant 0 : index
    %c0_2 = arith.constant 0 : index
    %1 = vector.load %arg1[%c0_1, %c0_2] : memref<144x64xf32, #tpu.memory_space<vmem>>, vector<3x16xf32>
    %cst = arith.constant dense<0.000000e+00> : vector<64x16xf32>
    %2 = tpu.matmul %0, %1, %cst {dimension_numbers = #tpu.dot_dimension_numbers<[1], [0], [0], [1], [0, 0, 1, 1], [], []>} : vector<64x3xf32>, vector<3x16xf32>, vector<64x16xf32> -> vector<64x16xf32>
    %c16 = arith.constant 16 : index
    %c0_3 = arith.constant 0 : index
    %3 = vector.load %arg1[%c16, %c0_3] : memref<144x64xf32, #tpu.memory_space<vmem>>, vector<1x16xf32>
    %4 = vector.broadcast %3 : vector<1x16xf32> to vector<64x16xf32>
    %5 = arith.addf %2, %4 : vector<64x16xf32>
    %c8 = arith.constant 8 : index
    %c0_4 = arith.constant 0 : index
    %6 = vector.load %arg1[%c8, %c0_4] : memref<144x64xf32, #tpu.memory_space<vmem>>, vector<3x16xf32>
    %cst_5 = arith.constant dense<0.000000e+00> : vector<64x16xf32>
    %7 = tpu.matmul %0, %6, %cst_5 {dimension_numbers = #tpu.dot_dimension_numbers<[1], [0], [0], [1], [0, 0, 1, 1], [], []>} : vector<64x3xf32>, vector<3x16xf32>, vector<64x16xf32> -> vector<64x16xf32>
    %c24 = arith.constant 24 : index
    %c0_6 = arith.constant 0 : index
    %8 = vector.load %arg1[%c24, %c0_6] : memref<144x64xf32, #tpu.memory_space<vmem>>, vector<1x16xf32>
    %9 = vector.broadcast %8 : vector<1x16xf32> to vector<64x16xf32>
    %10 = arith.addf %7, %9 : vector<64x16xf32>
    %11 = math.tanh %5 : vector<64x16xf32>
    %12 = arith.negf %10 : vector<64x16xf32>
    %13 = math.exp %12 : vector<64x16xf32>
    %cst_7 = arith.constant 1.000000e+00 : f32
    %14 = vector.broadcast %cst_7 : f32 to vector<64x16xf32>
    %15 = arith.addf %14, %13 : vector<64x16xf32>
    %16 = arith.divf %14, %15 : vector<64x16xf32>
    %17 = arith.mulf %11, %16 : vector<64x16xf32>
    %c32 = arith.constant 32 : index
    %c0_8 = arith.constant 0 : index
    %18 = vector.load %arg1[%c32, %c0_8] : memref<144x64xf32, #tpu.memory_space<vmem>>, vector<16x16xf32>
    %cst_9 = arith.constant dense<0.000000e+00> : vector<64x16xf32>
    %19 = tpu.matmul %17, %18, %cst_9 {dimension_numbers = #tpu.dot_dimension_numbers<[1], [0], [0], [1], [0, 0, 1, 1], [], []>} : vector<64x16xf32>, vector<16x16xf32>, vector<64x16xf32> -> vector<64x16xf32>
    %c80 = arith.constant 80 : index
    %c0_10 = arith.constant 0 : index
    %20 = vector.load %arg1[%c80, %c0_10] : memref<144x64xf32, #tpu.memory_space<vmem>>, vector<64x64xf32>
    %cst_11 = arith.constant dense<0.000000e+00> : vector<64x16xf32>
    %21 = tpu.matmul %20, %19, %cst_11 {dimension_numbers = #tpu.dot_dimension_numbers<[1], [0], [0], [1], [0, 0, 1, 1], [], []>} : vector<64x64xf32>, vector<64x16xf32>, vector<64x16xf32> -> vector<64x16xf32>
    %c48 = arith.constant 48 : index
    %c0_12 = arith.constant 0 : index
    %22 = vector.load %arg1[%c48, %c0_12] : memref<144x64xf32, #tpu.memory_space<vmem>>, vector<1x16xf32>
    %23 = vector.broadcast %22 : vector<1x16xf32> to vector<64x16xf32>
    %24 = arith.addf %21, %23 : vector<64x16xf32>
    %cst_13 = arith.constant 0.000000e+00 : f32
    %25 = vector.broadcast %cst_13 : f32 to vector<64x16xf32>
    %26 = arith.maximumf %24, %25 : vector<64x16xf32>
    %27 = vector.shape_cast %26 : vector<64x16xf32> to vector<4x2x8x16xf32>
    %cst_14 = arith.constant dense<0.000000e+00> : vector<2x8x16xf32>
    %28 = vector.multi_reduction <add>, %27, %cst_14 [0] : vector<4x2x8x16xf32> to vector<2x8x16xf32>
    %cst_15 = arith.constant dense<0.000000e+00> : vector<2x8xf32>
    %29 = vector.multi_reduction <add>, %28, %cst_15 [2] : vector<2x8x16xf32> to vector<2x8xf32>
    %c72 = arith.constant 72 : index
    %c0_16 = arith.constant 0 : index
    %30 = vector.load %arg1[%c72, %c0_16] : memref<144x64xf32, #tpu.memory_space<vmem>>, vector<2x8xf32>
    %cst_17 = arith.constant 1.600000e+01 : f32
    %31 = vector.broadcast %cst_17 : f32 to vector<2x8xf32>
    %32 = arith.mulf %31, %30 : vector<2x8xf32>
    %33 = arith.addf %29, %32 : vector<2x8xf32>
    %cst_18 = arith.constant 1.562500e-02 : f32
    %34 = vector.broadcast %cst_18 : f32 to vector<2x8xf32>
    %35 = arith.mulf %33, %34 : vector<2x8xf32>
    %c56 = arith.constant 56 : index
    %c0_19 = arith.constant 0 : index
    %36 = vector.load %arg1[%c56, %c0_19] : memref<144x64xf32, #tpu.memory_space<vmem>>, vector<8x12xf32>
    %cst_20 = arith.constant dense<0.000000e+00> : vector<2x12xf32>
    %37 = tpu.matmul %35, %36, %cst_20 {dimension_numbers = #tpu.dot_dimension_numbers<[1], [0], [0], [1], [0, 0, 1, 1], [], []>} : vector<2x8xf32>, vector<8x12xf32>, vector<2x12xf32> -> vector<2x12xf32>
    %c64 = arith.constant 64 : index
    %c0_21 = arith.constant 0 : index
    %38 = vector.load %arg1[%c64, %c0_21] : memref<144x64xf32, #tpu.memory_space<vmem>>, vector<1x12xf32>
    %39 = vector.broadcast %38 : vector<1x12xf32> to vector<2x12xf32>
    %40 = arith.addf %37, %39 : vector<2x12xf32>
    %c0_22 = arith.constant 0 : index
    %c0_23 = arith.constant 0 : index
    %41 = vector.load %arg2[%c0_22, %c0_23] : memref<2x12xf32, #tpu.memory_space<vmem>>, vector<2x12xf32>
    tpu.vector_store %arg2[%c0_22, %c0_23], %40 {strides = array<i32>} : memref<2x12xf32, #tpu.memory_space<vmem>>, vector<2x12xf32>,
    return
  }
}

</mosaic_0001>

<llo_original>
// kernel: _forward.1
$region0: #{_forward.1}
  #allocation0 [shape = 'u32[]', space=smem, size = 0x4, offset = 0x4, fixed_abs, tag = 'smem constant byte address 0x4 - core index']
  #allocation1 [shape = 'u32[144,128]{1,0:T(1,128)}', space=vmem, size = 0x12000, scoped, tag = 'internal scratch']
  %s0 = inlined_call_operand.vmem [shape: f32[64,3], index: 0, kind: input, shape index: {}]
  %s1 = inlined_call_operand.vmem [shape: f32[144,64], index: 1, kind: input, shape index: {}]
  %s2 = inlined_call_operand.vmem [shape: f32[2,12], index: 2, kind: output, shape index: {}]
  %s3 = sld [smem:[#allocation0]]
  $region18: #{_forward.1} parent=0
    _
  %s5 = ssub.s32 1, %s3
  %s6 = scalar_select 0, %s5, %s3
  // Predicated region
  $region2: #{_forward.1} parent=0 // pred_check
    _
  $region3: #{_forward.1} parent=0 // pred_check_branch
    %8 = sbr.rel (0) target = $region5
  $region4: #{_forward.1} parent=0 // pred_region
    _
  $region5: #{_forward.1} parent=0 // pred_fallthru
    _
  // Predicated region
  $region6: #{_forward.1} parent=0 // pred_check
    _
  $region7: #{_forward.1} parent=0 // pred_check_branch
    %10 = sbr.rel (0) target = $region9
  $region8: #{_forward.1} parent=0 // pred_region
    _
  $region9: #{_forward.1} parent=0 // pred_fallthru
    _
  %v11 = vld [vmem:[%s0] sm:$0xff]
  %v12 = vld [vmem:[%s0 + $0x8] sm:$0xff]
  %v13 = vld [vmem:[%s0 + $0x10] sm:$0xff]
  %v14 = vld [vmem:[%s0 + $0x18] sm:$0xff]
  %v15 = vld [vmem:[%s0 + $0x20] sm:$0xff]
  %v16 = vld [vmem:[%s0 + $0x28] sm:$0xff]
  %v17 = vld [vmem:[%s0 + $0x30] sm:$0xff]
  %v18 = vld [vmem:[%s0 + $0x38] sm:$0xff]
  %v19 = vld [vmem:[%s1] sm:$0x7]
  %v20 = vld [vmem:[%s1 + $0x10] sm:$0x1]
  %v21 = vlaneseq
  %v22 = vshrl.u32 %v21, 7
  %v23 = vsub.s32 0, %v22
  %v24 = vrot.slane %v20, %v23
  %vm25 = vcmask 23552
  %v27 = vsel %vm25, %v11, 0
  %v30 = vsel %vm25, %v12, 0
  %v33 = vsel %vm25, %v13, 0
  %v36 = vsel %vm25, %v14, 0
  %v39 = vsel %vm25, %v15, 0
  %v42 = vsel %vm25, %v16, 0
  %v45 = vsel %vm25, %v17, 0
  %v48 = vsel %vm25, %v18, 0
  %vm50 = vcmask 1042432
  %v52 = vsel %vm50, %v19, 0
  %54 = vmatprep.subr.mxu0 0.0
  %55 = vmatpush1.msra.mxu0 %v52
  %56 = vmatprep.subr.mxu0 0.0
  %57 = vmatpush1.msra.mxu0 0.0
  %58 = vmatprep.subr.mxu0 0.0
  %59 = vmatpush1.msra.mxu0 0.0
  %60 = vmatprep.subr.mxu0 0.0
  %61 = vmatpush1.msra.mxu0 0.0
  %62 = vmatprep.subr.mxu0 0.0
  %63 = vmatpush1.msra.mxu0 0.0
  %64 = vmatprep.subr.mxu0 0.0
  %65 = vmatpush1.msra.mxu0 0.0
  %66 = vmatprep.subr.mxu0 0.0
  %67 = vmatpush1.msra.mxu0 0.0
  %68 = vmatprep.subr.mxu0 0.0
  %69 = vmatpush1.msra.mxu0 0.0
  %70 = vmatprep.subr.mxu0 0.0
  %71 = vmatpush1.msra.mxu0 0.0
  %72 = vmatprep.subr.mxu0 0.0
  %73 = vmatpush1.msra.mxu0 0.0
  %74 = vmatprep.subr.mxu0 0.0
  %75 = vmatpush1.msra.mxu0 0.0
  %76 = vmatprep.subr.mxu0 0.0
  %77 = vmatpush1.msra.mxu0 0.0
  %78 = vmatprep.subr.mxu0 0.0
  %79 = vmatpush1.msra.mxu0 0.0
  %80 = vmatprep.subr.mxu0 0.0
  %81 = vmatpush1.msra.mxu0 0.0
  %82 = vmatprep.subr.mxu0 0.0
  %83 = vmatpush1.msra.mxu0 0.0
  %84 = vmatprep.subr.mxu0 0.0
  %85 = vmatpush1.msra.mxu0 0.0
  %86 = vmatprep.subr.mxu0 0.0
  %87 = vmatpush1.msra.mxu0 0.0
  %88 = vmatprep.subr.mxu0 0.0
  %89 = vmatpush1.msra.mxu0 0.0
  %90 = vmatprep.subr.mxu0 0.0
  %91 = vmatpush1.msra.mxu0 0.0
  %92 = vmatprep.subr.mxu0 0.0
  %93 = vmatpush1.msra.mxu0 0.0
  %94 = vmatprep.subr.mxu0 0.0
  %95 = vmatpush1.msra.mxu0 0.0
  %96 = vmatprep.subr.mxu0 0.0
  %97 = vmatpush1.msra.mxu0 0.0
  %98 = vmatprep.subr.mxu0 0.0
  %99 = vmatpush1.msra.mxu0 0.0
  %100 = vmatprep.subr.mxu0 0.0
  %101 = vmatpush1.msra.mxu0 0.0
  %102 = vmatprep.subr.mxu0 0.0
  %103 = vmatpush1.msra.mxu0 0.0
  %104 = vmatprep.subr.mxu0 0.0
  %105 = vmatpush1.msra.mxu0 0.0
  %106 = vmatprep.subr.mxu0 0.0
  %107 = vmatpush1.msra.mxu0 0.0
  %108 = vmatprep.subr.mxu0 0.0
  %109 = vmatpush1.msra.mxu0 0.0
  %110 = vmatprep.subr.mxu0 0.0
  %111 = vmatpush1.msra.mxu0 0.0
  %112 = vmatprep.subr.mxu0 0.0
  %113 = vmatpush1.msra.mxu0 0.0
  %114 = vmatprep.subr.mxu0 0.0
  %115 = vmatpush1.msra.mxu0 0.0
  %116 = vmatprep.subr.mxu0 0.0
  %117 = vmatpush1.msra.mxu0 0.0
  %118 = vmatprep.mubr.f32.mxu0 0.0
  %119 = vmatmul.mubr.f32.gmra.mrb[0].mxu0 %v27
  %v120 = vpop.f32.mrb[0].mxu0
  %v121 = vadd.f32 %v24, %v120
  %v122 = vpop.f32.mrb[0].mxu0
  %123 = vmatprep.mubr.f32.mxu0 0.0
  %124 = vmatmul.mubr.f32.gmra.mrb[0].mxu0 %v30
  %v125 = vpop.f32.mrb[0].mxu0
  %v126 = vadd.f32 %v24, %v125
  %v127 = vpop.f32.mrb[0].mxu0
  %128 = vmatprep.mubr.f32.mxu0 0.0
  %129 = vmatmul.mubr.f32.gmra.mrb[0].mxu0 %v33
  %v130 = vpop.f32.mrb[0].mxu0
  %v131 = vadd.f32 %v24, %v130
  %v132 = vpop.f32.mrb[0].mxu0
  %133 = vmatprep.mubr.f32.mxu0 0.0
  %134 = vmatmul.mubr.f32.gmra.mrb[0].mxu0 %v36
  %v135 = vpop.f32.mrb[0].mxu0
  %v136 = vadd.f32 %v24, %v135
  %v137 = vpop.f32.mrb[0].mxu0
  %138 = vmatprep.mubr.f32.mxu0 0.0
  %139 = vmatmul.mubr.f32.gmra.mrb[0].mxu0 %v39
  %v140 = vpop.f32.mrb[0].mxu0
  %v141 = vadd.f32 %v24, %v140
  %v142 = vpop.f32.mrb[0].mxu0
  %143 = vmatprep.mubr.f32.mxu0 0.0
  %144 = vmatmul.mubr.f32.gmra.mrb[0].mxu0 %v42
  %v145 = vpop.f32.mrb[0].mxu0
  %v146 = vadd.f32 %v24, %v145
  %v147 = vpop.f32.mrb[0].mxu0
  %148 = vmatprep.mubr.f32.mxu0 0.0
  %149 = vmatmul.mubr.f32.gmra.mrb[0].mxu0 %v45
  %v150 = vpop.f32.mrb[0].mxu0
  %v151 = vadd.f32 %v24, %v150
  %v152 = vpop.f32.mrb[0].mxu0
  %153 = vmatprep.mubr.f32.mxu0 0.0
  %154 = vmatmul.mubr.f32.gmra.mrb[0].mxu0 %v48
  %v155 = vpop.f32.mrb[0].mxu0
  %v156 = vadd.f32 %v24, %v155
  %v157 = vpop.f32.mrb[0].mxu0
  %158 = vdwg.mxu0
  %v159 = vld [vmem:[%s1 + $0x8] sm:$0x7]
  %v160 = vld [vmem:[%s1 + $0x18] sm:$0x1]
  %v161 = vlaneseq
  %v162 = vshrl.u32 %v161, 7
  %v163 = vsub.s32 0, %v162
  %v164 = vrot.slane %v160, %v163
  %v166 = vsel %vm50, %v159, 0
  %168 = vmatprep.subr.mxu0 0.0
  %169 = vmatpush1.msra.mxu0 %v166
  %170 = vmatprep.subr.mxu0 0.0
  %171 = vmatpush1.msra.mxu0 0.0
  %172 = vmatprep.subr.mxu0 0.0
  %173 = vmatpush1.msra.mxu0 0.0
  %174 = vmatprep.subr.mxu0 0.0
  %175 = vmatpush1.msra.mxu0 0.0
  %176 = vmatprep.subr.mxu0 0.0
  %177 = vmatpush1.msra.mxu0 0.0
  %178 = vmatprep.subr.mxu0 0.0
  %179 = vmatpush1.msra.mxu0 0.0
  %180 = vmatprep.subr.mxu0 0.0
  %181 = vmatpush1.msra.mxu0 0.0
  %182 = vmatprep.subr.mxu0 0.0
  %183 = vmatpush1.msra.mxu0 0.0
  %184 = vmatprep.subr.mxu0 0.0
  %185 = vmatpush1.msra.mxu0 0.0
  %186 = vmatprep.subr.mxu0 0.0
  %187 = vmatpush1.msra.mxu0 0.0
  %188 = vmatprep.subr.mxu0 0.0
  %189 = vmatpush1.msra.mxu0 0.0
  %190 = vmatprep.subr.mxu0 0.0
  %191 = vmatpush1.msra.mxu0 0.0
  %192 = vmatprep.subr.mxu0 0.0
  %193 = vmatpush1.msra.mxu0 0.0
  %194 = vmatprep.subr.mxu0 0.0
  %195 = vmatpush1.msra.mxu0 0.0
  %196 = vmatprep.subr.mxu0 0.0
  %197 = vmatpush1.msra.mxu0 0.0
  %198 = vmatprep.subr.mxu0 0.0
  %199 = vmatpush1.msra.mxu0 0.0
  %200 = vmatprep.subr.mxu0 0.0
  %201 = vmatpush1.msra.mxu0 0.0
  %202 = vmatprep.subr.mxu0 0.0
  %203 = vmatpush1.msra.mxu0 0.0
  %204 = vmatprep.subr.mxu0 0.0
  %205 = vmatpush1.msra.mxu0 0.0
  %206 = vmatprep.subr.mxu0 0.0
  %207 = vmatpush1.msra.mxu0 0.0
  %208 = vmatprep.subr.mxu0 0.0
  %209 = vmatpush1.msra.mxu0 0.0
  %210 = vmatprep.subr.mxu0 0.0
  %211 = vmatpush1.msra.mxu0 0.0
  %212 = vmatprep.subr.mxu0 0.0
  %213 = vmatpush1.msra.mxu0 0.0
  %214 = vmatprep.subr.mxu0 0.0
  %215 = vmatpush1.msra.mxu0 0.0
  %216 = vmatprep.subr.mxu0 0.0
  %217 = vmatpush1.msra.mxu0 0.0
  %218 = vmatprep.subr.mxu0 0.0
  %219 = vmatpush1.msra.mxu0 0.0
  %220 = vmatprep.subr.mxu0 0.0
  %221 = vmatpush1.msra.mxu0 0.0
  %222 = vmatprep.subr.mxu0 0.0
  %223 = vmatpush1.msra.mxu0 0.0
  %224 = vmatprep.subr.mxu0 0.0
  %225 = vmatpush1.msra.mxu0 0.0
  %226 = vmatprep.subr.mxu0 0.0
  %227 = vmatpush1.msra.mxu0 0.0
  %228 = vmatprep.subr.mxu0 0.0
  %229 = vmatpush1.msra.mxu0 0.0
  %230 = vmatprep.subr.mxu0 0.0
  %231 = vmatpush1.msra.mxu0 0.0
  %232 = vmatprep.mubr.f32.mxu0 0.0
  %233 = vmatmul.mubr.f32.gmra.mrb[0].mxu0 %v27
  %v234 = vpop.f32.mrb[0].mxu0
  %v235 = vadd.f32 %v164, %v234
  %v236 = vpop.f32.mrb[0].mxu0
  %237 = vmatprep.mubr.f32.mxu0 0.0
  %238 = vmatmul.mubr.f32.gmra.mrb[0].mxu0 %v30
  %v239 = vpop.f32.mrb[0].mxu0
  %v240 = vadd.f32 %v164, %v239
  %v241 = vpop.f32.mrb[0].mxu0
  %242 = vmatprep.mubr.f32.mxu0 0.0
  %243 = vmatmul.mubr.f32.gmra.mrb[0].mxu0 %v33
  %v244 = vpop.f32.mrb[0].mxu0
  %v245 = vadd.f32 %v164, %v244
  %v246 = vpop.f32.mrb[0].mxu0
  %247 = vmatprep.mubr.f32.mxu0 0.0
  %248 = vmatmul.mubr.f32.gmra.mrb[0].mxu0 %v36
  %v249 = vpop.f32.mrb[0].mxu0
  %v250 = vadd.f32 %v164, %v249
  %v251 = vpop.f32.mrb[0].mxu0
  %252 = vmatprep.mubr.f32.mxu0 0.0
  %253 = vmatmul.mubr.f32.gmra.mrb[0].mxu0 %v39
  %v254 = vpop.f32.mrb[0].mxu0
  %v255 = vadd.f32 %v164, %v254
  %v256 = vpop.f32.mrb[0].mxu0
  %257 = vmatprep.mubr.f32.mxu0 0.0
  %258 = vmatmul.mubr.f32.gmra.mrb[0].mxu0 %v42
  %v259 = vpop.f32.mrb[0].mxu0
  %v260 = vadd.f32 %v164, %v259
  %v261 = vpop.f32.mrb[0].mxu0
  %262 = vmatprep.mubr.f32.mxu0 0.0
  %263 = vmatmul.mubr.f32.gmra.mrb[0].mxu0 %v45
  %v264 = vpop.f32.mrb[0].mxu0
  %v265 = vadd.f32 %v164, %v264
  %v266 = vpop.f32.mrb[0].mxu0
  %267 = vmatprep.mubr.f32.mxu0 0.0
  %268 = vmatmul.mubr.f32.gmra.mrb[0].mxu0 %v48
  %v269 = vpop.f32.mrb[0].mxu0
  %v270 = vadd.f32 %v164, %v269
  %v271 = vpop.f32.mrb[0].mxu0
  %272 = vdwg.mxu0
  %v273 = vtanh.pop %v121
  %v274 = vtanh.pop %v126
  %v275 = vtanh.pop %v131
  %v276 = vtanh.pop %v136
  %v277 = vtanh.pop %v141
  %v278 = vtanh.pop %v146
  %v279 = vtanh.pop %v151
  %v280 = vtanh.pop %v156
  %v281 = vxor.u32 %v235, 2147483648
  %v282 = vxor.u32 %v240, 2147483648
  %v283 = vxor.u32 %v245, 2147483648
  %v284 = vxor.u32 %v250, 2147483648
  %v285 = vxor.u32 %v255, 2147483648
  %v286 = vxor.u32 %v260, 2147483648
  %v287 = vxor.u32 %v265, 2147483648
  %v288 = vxor.u32 %v270, 2147483648
  %v289 = vmul.f32 %v281, 1.442695
  %v290 = vpow.pop %v289
  %v291 = vmul.f32 %v282, 1.442695
  %v292 = vpow.pop %v291
  %v293 = vmul.f32 %v283, 1.442695
  %v294 = vpow.pop %v293
  %v295 = vmul.f32 %v284, 1.442695
  %v296 = vpow.pop %v295
  %v297 = vmul.f32 %v285, 1.442695
  %v298 = vpow.pop %v297
  %v299 = vmul.f32 %v286, 1.442695
  %v300 = vpow.pop %v299
  %v301 = vmul.f32 %v287, 1.442695
  %v302 = vpow.pop %v301
  %v303 = vmul.f32 %v288, 1.442695
  %v304 = vpow.pop %v303
  %v305 = vadd.f32 %v290, 1.0
  %v306 = vadd.f32 %v292, 1.0
  %v307 = vadd.f32 %v294, 1.0
  %v308 = vadd.f32 %v296, 1.0
  %v309 = vadd.f32 %v298, 1.0
  %v310 = vadd.f32 %v300, 1.0
  %v311 = vadd.f32 %v302, 1.0
  %v312 = vadd.f32 %v304, 1.0
  %v313 = vrcp.pop %v305
  %v314 = vmul.f32 1.0, %v313
  %v315 = vrcp.pop %v306
  %v316 = vmul.f32 1.0, %v315
  %v317 = vrcp.pop %v307
  %v318 = vmul.f32 1.0, %v317
  %v319 = vrcp.pop %v308
  %v320 = vmul.f32 1.0, %v319
  %v321 = vrcp.pop %v309
  %v322 = vmul.f32 1.0, %v321
  %v323 = vrcp.pop %v310
  %v324 = vmul.f32 1.0, %v323
  %v325 = vrcp.pop %v311
  %v326 = vmul.f32 1.0, %v325
  %v327 = vrcp.pop %v312
  %v328 = vmul.f32 1.0, %v327
  %v329 = vmul.f32 %v273, %v314
  %v330 = vmul.f32 %v274, %v316
  %v331 = vmul.f32 %v275, %v318
  %v332 = vmul.f32 %v276, %v320
  %v333 = vmul.f32 %v277, %v322
  %v334 = vmul.f32 %v278, %v324
  %v335 = vmul.f32 %v279, %v326
  %v336 = vmul.f32 %v280, %v328
  %v337 = vld [vmem:[%s1 + $0x20] sm:$0xff]
  %v338 = vld [vmem:[%s1 + $0x28] sm:$0xff]
  %vm339 = vcmask 130048
  %v341 = vsel %vm339, %v329, 0
  %v344 = vsel %vm339, %v330, 0
  %v347 = vsel %vm339, %v331, 0
  %v350 = vsel %vm339, %v332, 0
  %v353 = vsel %vm339, %v333, 0
  %v356 = vsel %vm339, %v334, 0
  %v359 = vsel %vm339, %v335, 0
  %v362 = vsel %vm339, %v336, 0
  %364 = vmatprep.subr.mxu0 0.0
  %365 = vmatpush1.msra.mxu0 %v337
  %366 = vmatprep.subr.mxu0 0.0
  %367 = vmatpush1.msra.mxu0 %v338
  %368 = vmatprep.subr.mxu0 0.0
  %369 = vmatpush1.msra.mxu0 0.0
  %370 = vmatprep.subr.mxu0 0.0
  %371 = vmatpush1.msra.mxu0 0.0
  %372 = vmatprep.subr.mxu0 0.0
  %373 = vmatpush1.msra.mxu0 0.0
  %374 = vmatprep.subr.mxu0 0.0
  %375 = vmatpush1.msra.mxu0 0.0
  %376 = vmatprep.subr.mxu0 0.0
  %377 = vmatpush1.msra.mxu0 0.0
  %378 = vmatprep.subr.mxu0 0.0
  %379 = vmatpush1.msra.mxu0 0.0
  %380 = vmatprep.subr.mxu0 0.0
  %381 = vmatpush1.msra.mxu0 0.0
  %382 = vmatprep.subr.mxu0 0.0
  %383 = vmatpush1.msra.mxu0 0.0
  %384 = vmatprep.subr.mxu0 0.0
  %385 = vmatpush1.msra.mxu0 0.0
  %386 = vmatprep.subr.mxu0 0.0
  %387 = vmatpush1.msra.mxu0 0.0
  %388 = vmatprep.subr.mxu0 0.0
  %389 = vmatpush1.msra.mxu0 0.0
  %390 = vmatprep.subr.mxu0 0.0
  %391 = vmatpush1.msra.mxu0 0.0
  %392 = vmatprep.subr.mxu0 0.0
  %393 = vmatpush1.msra.mxu0 0.0
  %394 = vmatprep.subr.mxu0 0.0
  %395 = vmatpush1.msra.mxu0 0.0
  %396 = vmatprep.subr.mxu0 0.0
  %397 = vmatpush1.msra.mxu0 0.0
  %398 = vmatprep.subr.mxu0 0.0
  %399 = vmatpush1.msra.mxu0 0.0
  %400 = vmatprep.subr.mxu0 0.0
  %401 = vmatpush1.msra.mxu0 0.0
  %402 = vmatprep.subr.mxu0 0.0
  %403 = vmatpush1.msra.mxu0 0.0
  %404 = vmatprep.subr.mxu0 0.0
  %405 = vmatpush1.msra.mxu0 0.0
  %406 = vmatprep.subr.mxu0 0.0
  %407 = vmatpush1.msra.mxu0 0.0
  %408 = vmatprep.subr.mxu0 0.0
  %409 = vmatpush1.msra.mxu0 0.0
  %410 = vmatprep.subr.mxu0 0.0
  %411 = vmatpush1.msra.mxu0 0.0
  %412 = vmatprep.subr.mxu0 0.0
  %413 = vmatpush1.msra.mxu0 0.0
  %414 = vmatprep.subr.mxu0 0.0
  %415 = vmatpush1.msra.mxu0 0.0
  %416 = vmatprep.subr.mxu0 0.0
  %417 = vmatpush1.msra.mxu0 0.0
  %418 = vmatprep.subr.mxu0 0.0
  %419 = vmatpush1.msra.mxu0 0.0
  %420 = vmatprep.subr.mxu0 0.0
  %421 = vmatpush1.msra.mxu0 0.0
  %422 = vmatprep.subr.mxu0 0.0
  %423 = vmatpush1.msra.mxu0 0.0
  %424 = vmatprep.subr.mxu0 0.0
  %425 = vmatpush1.msra.mxu0 0.0
  %426 = vmatprep.subr.mxu0 0.0
  %427 = vmatpush1.msra.mxu0 0.0
  %428 = vmatprep.mubr.f32.mxu0 0.0
  %429 = vmatmul.mubr.f32.gmra.mrb[0].mxu0 %v341
  %v430 = vpop.f32.mrb[0].mxu0
  %v431 = vadd.f32 0.0, %v430
  %v432 = vpop.f32.mrb[0].mxu0
  %433 = vmatprep.mubr.f32.mxu0 0.0
  %434 = vmatmul.mubr.f32.gmra.mrb[0].mxu0 %v344
  %v435 = vpop.f32.mrb[0].mxu0
  %v436 = vadd.f32 0.0, %v435
  %v437 = vpop.f32.mrb[0].mxu0
  %438 = vmatprep.mubr.f32.mxu0 0.0
  %439 = vmatmul.mubr.f32.gmra.mrb[0].mxu0 %v347
  %v440 = vpop.f32.mrb[0].mxu0
  %v441 = vadd.f32 0.0, %v440
  %v442 = vpop.f32.mrb[0].mxu0
  %443 = vmatprep.mubr.f32.mxu0 0.0
  %444 = vmatmul.mubr.f32.gmra.mrb[0].mxu0 %v350
  %v445 = vpop.f32.mrb[0].mxu0
  %v446 = vadd.f32 0.0, %v445
  %v447 = vpop.f32.mrb[0].mxu0
  %448 = vmatprep.mubr.f32.mxu0 0.0
  %449 = vmatmul.mubr.f32.gmra.mrb[0].mxu0 %v353
  %v450 = vpop.f32.mrb[0].mxu0
  %v451 = vadd.f32 0.0, %v450
  %v452 = vpop.f32.mrb[0].mxu0
  %453 = vmatprep.mubr.f32.mxu0 0.0
  %454 = vmatmul.mubr.f32.gmra.mrb[0].mxu0 %v356
  %v455 = vpop.f32.mrb[0].mxu0
  %v456 = vadd.f32 0.0, %v455
  %v457 = vpop.f32.mrb[0].mxu0
  %458 = vmatprep.mubr.f32.mxu0 0.0
  %459 = vmatmul.mubr.f32.gmra.mrb[0].mxu0 %v359
  %v460 = vpop.f32.mrb[0].mxu0
  %v461 = vadd.f32 0.0, %v460
  %v462 = vpop.f32.mrb[0].mxu0
  %463 = vmatprep.mubr.f32.mxu0 0.0
  %464 = vmatmul.mubr.f32.gmra.mrb[0].mxu0 %v362
  %v465 = vpop.f32.mrb[0].mxu0
  %v466 = vadd.f32 0.0, %v465
  %v467 = vpop.f32.mrb[0].mxu0
  %468 = vdwg.mxu0
  %v469 = vld [vmem:[%s1 + $0x50] sm:$0xff]
  %v470 = vld [vmem:[%s1 + $0x58] sm:$0xff]
  %v471 = vld [vmem:[%s1 + $0x60] sm:$0xff]
  %v472 = vld [vmem:[%s1 + $0x68] sm:$0xff]
  %v473 = vld [vmem:[%s1 + $0x70] sm:$0xff]
  %v474 = vld [vmem:[%s1 + $0x78] sm:$0xff]
  %v475 = vld [vmem:[%s1 + $0x80] sm:$0xff]
  %v476 = vld [vmem:[%s1 + $0x88] sm:$0xff]
  %v477 = vld [vmem:[%s1 + $0x30] sm:$0x1]
  %v478 = vlaneseq
  %v479 = vshrl.u32 %v478, 7
  %v480 = vsub.s32 0, %v479
  %v481 = vrot.slane %v477, %v480
  %vm482 = vcmask 523264
  %v484 = vsel %vm482, %v469, 0
  %v487 = vsel %vm482, %v470, 0
  %v490 = vsel %vm482, %v471, 0
  %v493 = vsel %vm482, %v472, 0
  %v496 = vsel %vm482, %v473, 0
  %v499 = vsel %vm482, %v474, 0
  %v502 = vsel %vm482, %v475, 0
  %v505 = vsel %vm482, %v476, 0
  %507 = vmatprep.subr.mxu0 0.0
  %508 = vmatpush1.msra.mxu0 %v431
  %509 = vmatprep.subr.mxu0 0.0
  %510 = vmatpush1.msra.mxu0 %v436
  %511 = vmatprep.subr.mxu0 0.0
  %512 = vmatpush1.msra.mxu0 %v441
  %513 = vmatprep.subr.mxu0 0.0
  %514 = vmatpush1.msra.mxu0 %v446
  %515 = vmatprep.subr.mxu0 0.0
  %516 = vmatpush1.msra.mxu0 %v451
  %517 = vmatprep.subr.mxu0 0.0
  %518 = vmatpush1.msra.mxu0 %v456
  %519 = vmatprep.subr.mxu0 0.0
  %520 = vmatpush1.msra.mxu0 %v461
  %521 = vmatprep.subr.mxu0 0.0
  %522 = vmatpush1.msra.mxu0 %v466
  %523 = vmatprep.subr.mxu0 0.0
  %524 = vmatpush1.msra.mxu0 0.0
  %525 = vmatprep.subr.mxu0 0.0
  %526 = vmatpush1.msra.mxu0 0.0
  %527 = vmatprep.subr.mxu0 0.0
  %528 = vmatpush1.msra.mxu0 0.0
  %529 = vmatprep.subr.mxu0 0.0
  %530 = vmatpush1.msra.mxu0 0.0
  %531 = vmatprep.subr.mxu0 0.0
  %532 = vmatpush1.msra.mxu0 0.0
  %533 = vmatprep.subr.mxu0 0.0
  %534 = vmatpush1.msra.mxu0 0.0
  %535 = vmatprep.subr.mxu0 0.0
  %536 = vmatpush1.msra.mxu0 0.0
  %537 = vmatprep.subr.mxu0 0.0
  %538 = vmatpush1.msra.mxu0 0.0
  %539 = vmatprep.subr.mxu0 0.0
  %540 = vmatpush1.msra.mxu0 0.0
  %541 = vmatprep.subr.mxu0 0.0
  %542 = vmatpush1.msra.mxu0 0.0
  %543 = vmatprep.subr.mxu0 0.0
  %544 = vmatpush1.msra.mxu0 0.0
  %545 = vmatprep.subr.mxu0 0.0
  %546 = vmatpush1.msra.mxu0 0.0
  %547 = vmatprep.subr.mxu0 0.0
  %548 = vmatpush1.msra.mxu0 0.0
  %549 = vmatprep.subr.mxu0 0.0
  %550 = vmatpush1.msra.mxu0 0.0
  %551 = vmatprep.subr.mxu0 0.0
  %552 = vmatpush1.msra.mxu0 0.0
  %553 = vmatprep.subr.mxu0 0.0
  %554 = vmatpush1.msra.mxu0 0.0
  %555 = vmatprep.subr.mxu0 0.0
  %556 = vmatpush1.msra.mxu0 0.0
  %557 = vmatprep.subr.mxu0 0.0
  %558 = vmatpush1.msra.mxu0 0.0
  %559 = vmatprep.subr.mxu0 0.0
  %560 = vmatpush1.msra.mxu0 0.0
  %561 = vmatprep.subr.mxu0 0.0
  %562 = vmatpush1.msra.mxu0 0.0
  %563 = vmatprep.subr.mxu0 0.0
  %564 = vmatpush1.msra.mxu0 0.0
  %565 = vmatprep.subr.mxu0 0.0
  %566 = vmatpush1.msra.mxu0 0.0
  %567 = vmatprep.subr.mxu0 0.0
  %568 = vmatpush1.msra.mxu0 0.0
  %569 = vmatprep.subr.mxu0 0.0
  %570 = vmatpush1.msra.mxu0 0.0
  %571 = vmatprep.mubr.f32.mxu0 0.0
  %572 = vmatmul.mubr.f32.gmra.mrb[0].mxu0 %v484
  %v573 = vpop.f32.mrb[0].mxu0
  %v574 = vadd.f32 %v481, %v573
  %v575 = vpop.f32.mrb[0].mxu0
  %576 = vmatprep.mubr.f32.mxu0 0.0
  %577 = vmatmul.mubr.f32.gmra.mrb[0].mxu0 %v487
  %v578 = vpop.f32.mrb[0].mxu0
  %v579 = vadd.f32 %v481, %v578
  %v580 = vpop.f32.mrb[0].mxu0
  %581 = vmatprep.mubr.f32.mxu0 0.0
  %582 = vmatmul.mubr.f32.gmra.mrb[0].mxu0 %v490
  %v583 = vpop.f32.mrb[0].mxu0
  %v584 = vadd.f32 %v481, %v583
  %v585 = vpop.f32.mrb[0].mxu0
  %586 = vmatprep.mubr.f32.mxu0 0.0
  %587 = vmatmul.mubr.f32.gmra.mrb[0].mxu0 %v493
  %v588 = vpop.f32.mrb[0].mxu0
  %v589 = vadd.f32 %v481, %v588
  %v590 = vpop.f32.mrb[0].mxu0
  %591 = vmatprep.mubr.f32.mxu0 0.0
  %592 = vmatmul.mubr.f32.gmra.mrb[0].mxu0 %v496
  %v593 = vpop.f32.mrb[0].mxu0
  %v594 = vadd.f32 %v481, %v593
  %v595 = vpop.f32.mrb[0].mxu0
  %596 = vmatprep.mubr.f32.mxu0 0.0
  %597 = vmatmul.mubr.f32.gmra.mrb[0].mxu0 %v499
  %v598 = vpop.f32.mrb[0].mxu0
  %v599 = vadd.f32 %v481, %v598
  %v600 = vpop.f32.mrb[0].mxu0
  %601 = vmatprep.mubr.f32.mxu0 0.0
  %602 = vmatmul.mubr.f32.gmra.mrb[0].mxu0 %v502
  %v603 = vpop.f32.mrb[0].mxu0
  %v604 = vadd.f32 %v481, %v603
  %v605 = vpop.f32.mrb[0].mxu0
  %606 = vmatprep.mubr.f32.mxu0 0.0
  %607 = vmatmul.mubr.f32.gmra.mrb[0].mxu0 %v505
  %v608 = vpop.f32.mrb[0].mxu0
  %v609 = vadd.f32 %v481, %v608
  %v610 = vpop.f32.mrb[0].mxu0
  %611 = vdwg.mxu0
  %v612 = vmax.f32 %v574, 0.0
  %v613 = vmax.f32 %v579, 0.0
  %v614 = vmax.f32 %v584, 0.0
  %v615 = vmax.f32 %v589, 0.0
  %v616 = vmax.f32 %v594, 0.0
  %v617 = vmax.f32 %v599, 0.0
  %v618 = vmax.f32 %v604, 0.0
  %v619 = vmax.f32 %v609, 0.0
  %v620 = vsel %vm339, %v612, 0.0
  %v621 = vsel %vm339, %v614, 0.0
  %v622 = vadd.f32 %v620, %v621
  %v623 = vsel %vm339, %v616, 0.0
  %v624 = vadd.f32 %v622, %v623
  %v625 = vsel %vm339, %v618, 0.0
  %v626 = vadd.f32 %v624, %v625
  %v627 = vsel %vm339, %v613, 0.0
  %v628 = vsel %vm339, %v615, 0.0
  %v629 = vadd.f32 %v627, %v628
  %v630 = vsel %vm339, %v617, 0.0
  %v631 = vadd.f32 %v629, %v630
  %v632 = vsel %vm339, %v619, 0.0
  %v633 = vadd.f32 %v631, %v632
  %v634 = vsel %vm339, %v626, 0.0
  %635 = vadd.xlane.f32.xlu0 %v634
  %v636 = vpop.xlane.xlu0 %635
  %v637 = vsel %vm339, %v633, 0.0
  %638 = vadd.xlane.f32.xlu0 %v637
  %v639 = vpop.xlane.xlu0 %638
  %v640 = vld [vmem:[%s1 + $0x48] sm:$0x3]
  %v641 = vmul.f32 %v640, 16.0
  %v643 = vlaneseq
  %v644 = vshrl.u32 %v643, 7
  %v645 = vsub.s32 0, %v644
  %v646 = vrot.slane %v641, %v645
  %648 = vbcast.lane.b32.xlu0 %v646, 256
  %v649 = vpop.permute.xlu0 %648
  %v650 = vlaneseq
  %v651 = vshrl.u32 %v650, 7
  %v652 = vsub.s32 1, %v651
  %v653 = vrot.slane %v641, %v652
  %655 = vbcast.lane.b32.xlu0 %v653, 256
  %v656 = vpop.permute.xlu0 %655
  %v659 = vadd.f32 %v636, %v649
  %v660 = vadd.f32 %v639, %v656
  %v661 = vmul.f32 %v659, 0.015625
  %v662 = vmul.f32 %v660, 0.015625
  %v663 = vld [vmem:[%s1 + $0x38] sm:$0xff]
  %v664 = vld [vmem:[%s1 + $0x40] sm:$0x1]
  %v665 = vlaneseq
  %v666 = vshrl.u32 %v665, 7
  %v667 = vsub.s32 0, %v666
  %v668 = vrot.slane %v664, %v667
  %671 = vset.pattern.permute.xlu0 0
  %672 = vperm.xlu0 %671, %v661
  %v673 = vpop.permute.xlu0 %672
  %674 = vset.pattern.permute.xlu0 0
  %675 = vperm.xlu0 %674, %v662
  %v676 = vpop.permute.xlu0 %675
  %v677 = vlaneseq
  %v678 = vand.u32 %v677, 127
  %v679 = vlaneseq
  %v680 = vshrl.u32 %v679, 7
  %v681 = vsub.s32 %v678, %v680
  %v682 = vrot.slane %v673, %v681
  %v683 = vlaneseq
  %v684 = vshrl.u32 %v683, 7
  %v685 = vsub.s32 %v678, %v684
  %v686 = vrot.slane %v676, %v685
  %vm687 = vcmask 1041409
  %v688 = vsel %vm687, %v686, %v682
  %vm689 = vcmask 64512
  %v690 = vsel %vm689, %v688, 0
  %692 = vmatprep.subr.mxu0 0.0
  %693 = vmatpush1.msra.mxu0 %v663
  %694 = vmatprep.subr.mxu0 0.0
  %695 = vmatpush1.msra.mxu0 0.0
  %696 = vmatprep.subr.mxu0 0.0
  %697 = vmatpush1.msra.mxu0 0.0
  %698 = vmatprep.subr.mxu0 0.0
  %699 = vmatpush1.msra.mxu0 0.0
  %700 = vmatprep.subr.mxu0 0.0
  %701 = vmatpush1.msra.mxu0 0.0
  %702 = vmatprep.subr.mxu0 0.0
  %703 = vmatpush1.msra.mxu0 0.0
  %704 = vmatprep.subr.mxu0 0.0
  %705 = vmatpush1.msra.mxu0 0.0
  %706 = vmatprep.subr.mxu0 0.0
  %707 = vmatpush1.msra.mxu0 0.0
  %708 = vmatprep.subr.mxu0 0.0
  %709 = vmatpush1.msra.mxu0 0.0
  %710 = vmatprep.subr.mxu0 0.0
  %711 = vmatpush1.msra.mxu0 0.0
  %712 = vmatprep.subr.mxu0 0.0
  %713 = vmatpush1.msra.mxu0 0.0
  %714 = vmatprep.subr.mxu0 0.0
  %715 = vmatpush1.msra.mxu0 0.0
  %716 = vmatprep.subr.mxu0 0.0
  %717 = vmatpush1.msra.mxu0 0.0
  %718 = vmatprep.subr.mxu0 0.0
  %719 = vmatpush1.msra.mxu0 0.0
  %720 = vmatprep.subr.mxu0 0.0
  %721 = vmatpush1.msra.mxu0 0.0
  %722 = vmatprep.subr.mxu0 0.0
  %723 = vmatpush1.msra.mxu0 0.0
  %724 = vmatprep.subr.mxu0 0.0
  %725 = vmatpush1.msra.mxu0 0.0
  %726 = vmatprep.subr.mxu0 0.0
  %727 = vmatpush1.msra.mxu0 0.0
  %728 = vmatprep.subr.mxu0 0.0
  %729 = vmatpush1.msra.mxu0 0.0
  %730 = vmatprep.subr.mxu0 0.0
  %731 = vmatpush1.msra.mxu0 0.0
  %732 = vmatprep.subr.mxu0 0.0
  %733 = vmatpush1.msra.mxu0 0.0
  %734 = vmatprep.subr.mxu0 0.0
  %735 = vmatpush1.msra.mxu0 0.0
  %736 = vmatprep.subr.mxu0 0.0
  %737 = vmatpush1.msra.mxu0 0.0
  %738 = vmatprep.subr.mxu0 0.0
  %739 = vmatpush1.msra.mxu0 0.0
  %740 = vmatprep.subr.mxu0 0.0
  %741 = vmatpush1.msra.mxu0 0.0
  %742 = vmatprep.subr.mxu0 0.0
  %743 = vmatpush1.msra.mxu0 0.0
  %744 = vmatprep.subr.mxu0 0.0
  %745 = vmatpush1.msra.mxu0 0.0
  %746 = vmatprep.subr.mxu0 0.0
  %747 = vmatpush1.msra.mxu0 0.0
  %748 = vmatprep.subr.mxu0 0.0
  %749 = vmatpush1.msra.mxu0 0.0
  %750 = vmatprep.subr.mxu0 0.0
  %751 = vmatpush1.msra.mxu0 0.0
  %752 = vmatprep.subr.mxu0 0.0
  %753 = vmatpush1.msra.mxu0 0.0
  %754 = vmatprep.subr.mxu0 0.0
  %755 = vmatpush1.msra.mxu0 0.0
  %756 = vmatprep.mubr.f32.mxu0 0.0
  %757 = vmatmul.mubr.f32.gmra.mrb[0].mxu0 %v690
  %v758 = vpop.f32.mrb[0].mxu0
  %v759 = vadd.f32 %v668, %v758
  %v760 = vpop.f32.mrb[0].mxu0
  %761 = vdwg.mxu0
  %vm762 = vcmask 91136
  %763 = vst.msk [vmem:[%s2] sm:$0x3] %vm762, %v759
  // Predicated region
  $region10: #{_forward.1} parent=0 // pred_check
    _
  $region11: #{_forward.1} parent=0 // pred_check_branch
    %765 = sbr.rel (0) target = $region13
  $region12: #{_forward.1} parent=0 // pred_region
    _
  $region13: #{_forward.1} parent=0 // pred_fallthru
    _
  // Predicated region
  $region14: #{_forward.1} parent=0 // pred_check
    _
  $region15: #{_forward.1} parent=0 // pred_check_branch
    %767 = sbr.rel (0) target = $region17
  $region16: #{_forward.1} parent=0 // pred_region
    _
  $region17: #{_forward.1} parent=0 // pred_fallthru
    _

</llo_original>
